<compile_context>
chip_gen: v7x
topology: tpu7x:2x2x1
jax: 0.10.0
libtpu: 0.0.40
codegen_flags: <defaults>
</compile_context>

<pallas_src>
import jax
import jax.numpy as jnp
from jax.experimental import pallas as pl
from jax.experimental.pallas import tpu as pltpu


def _copy_kernel(x_ref, o_ref):
    # Lane-dense identity copy of one (br, bc) tile.
    o_ref[...] = x_ref[...]


_MAX_LANE_COLS = 8192   # lane (last-dim) width cap: 32 KiB per row at f32
_MIN_GRID_BLOCKS = 4    # >=4 blocks -> double-buffer overlap + both v7x TCs busy


def _target_tile_bytes() -> int:
    """Per-generation tile budget so 2x(in+out) double buffers fit the default
    scoped-VMEM limit (16 MiB v5e / 32 MiB v6e / 32-of-64 MiB v7x)."""
    try:
        kind = jax.devices()[0].device_kind.lower()
    except Exception:
        kind = ""
    if "v5" in kind:
        return 3 << 20
    if "v6" in kind:
        return 4 << 20
    if "v7" in kind:
        return 5 << 20
    return 2 << 20


def _pick_slab(n: int, flat: int) -> tuple:
    """Row-major (rows, cols) view of the n*flat elements with a lane-dense
    last dim when possible (largest multiple of 128 <= 8192 dividing total)."""
    total = n * flat
    upper = min(_MAX_LANE_COLS, (total // 128) * 128)
    for cols in range(upper, 127, -128):
        if total % cols == 0:
            return total // cols, cols
    # No 128-multiple divisor: fall back to the natural (n, flat) view.
    return n, flat


def _pick_block(rows: int, cols: int, itemsize: int, target_bytes: int) -> tuple:
    """Block shape (br, bc): br a multiple of the sublane packing (or the full
    row extent), bc a multiple of 128 (or the full col extent), one block
    <= target_bytes, and >= _MIN_GRID_BLOCKS blocks whenever splittable."""
    sub = max(8, 32 // max(1, itemsize))

    # Lane dim: keep as wide as possible (lane density is the biggest lever).
    bc = cols if cols <= _MAX_LANE_COLS else _MAX_LANE_COLS

    # Sublane dim: as many rows as the tile budget allows (never the whole
    # array unless it genuinely fits one tile).
    budget_rows = max(1, target_bytes // max(1, bc * itemsize))
    if budget_rows >= rows:
        br = rows
    else:
        br = min(rows, max(sub, (budget_rows // sub) * sub))

    def nblocks(br_, bc_):
        return ((rows + br_ - 1) // br_) * ((cols + bc_ - 1) // bc_)

    # Force enough blocks for pipelining / megacore; shrink rows before lanes.
    while nblocks(br, bc) < _MIN_GRID_BLOCKS:
        if br > sub:
            br = max(sub, ((br // 2) // sub) * sub)
        elif bc > 128:
            bc = max(128, ((bc // 2) // 128) * 128)
        else:
            break
    return br, bc


def flatten_layer(x: jax.Array) -> jax.Array:
    """Pallas equivalent of FlattenLayer.forward: (N, ...) -> (N, prod(...))."""
    n = x.shape[0]
    flat = 1
    for d in x.shape[1:]:
        flat *= d

    itemsize = jnp.dtype(x.dtype).itemsize
    rows, cols = _pick_slab(n, flat)
    br, bc = _pick_block(rows, cols, itemsize, _target_tile_bytes())

    # Free metadata reshape for a contiguous input; kernel sees a lane-dense slab.
    x_slab = x.reshape(rows, cols)

    grid = ((rows + br - 1) // br, (cols + bc - 1) // bc)

    out_slab = pl.pallas_call(
        _copy_kernel,
        out_shape=jax.ShapeDtypeStruct((rows, cols), x.dtype),
        grid_spec=pl.GridSpec(
            grid=grid,
            in_specs=[pl.BlockSpec((br, bc), lambda i, j: (i, j))],
            out_specs=pl.BlockSpec((br, bc), lambda i, j: (i, j)),
        ),
        compiler_params=pltpu.CompilerParams(
            dimension_semantics=("parallel", "parallel"),
        ),
        cost_estimate=pl.CostEstimate(
            flops=0,
            transcendentals=0,
            bytes_accessed=2 * rows * cols * itemsize,
        ),
    )(x_slab)

    # Free metadata reshape back to the FlattenLayer output shape.
    # TODO(synk): in production, replace this whole kernel with
    # jnp.reshape(x, (n, -1)) — flatten of a contiguous array is a no-op.
    return out_slab.reshape(n, flat)


if __name__ == "__main__":
    key = jax.random.PRNGKey(0)
    # Small CNN-feature-map-like shape: batch=2, channels=4, spatial=16x16.
    x = jax.random.normal(key, (2, 4, 16, 16), dtype=jnp.float32)

    out = flatten_layer(x)
    out = jax.block_until_ready(out)

    # Verify against plain JAX reshape (same semantics as torch .view on NCHW).
    ref = x.reshape(x.shape[0], -1)
    assert out.shape == (2, 4 * 16 * 16), out.shape
    assert out.dtype == x.dtype
    assert bool(jnp.array_equal(out, ref))

    print("KERNEL_OK")
</pallas_src>

<mosaic_0001>
module attributes {stable_mosaic.version = 11 : i64} {
  func.func @_copy_kernel(%arg0: i32, %arg1: i32, %arg2: memref<1x512xf32, #tpu.memory_space<vmem>>, %arg3: memref<1x512xf32, #tpu.memory_space<vmem>>) attributes {dimension_semantics = [#tpu.dimension_semantics<parallel>, #tpu.dimension_semantics<parallel>], iteration_bounds = array<i64: 1, 4>, scalar_prefetch = 0 : i64, scratch_operands = 0 : i64, tpu.core_type = #tpu.core_type<tc>, window_params = [{transform_indices = @transform_0, window_bounds = array<i64: 1, 512>}, {transform_indices = @transform_1, window_bounds = array<i64: 1, 512>}]} {
    %c0 = arith.constant 0 : index
    %c0_0 = arith.constant 0 : index
    %0 = vector.load %arg2[%c0, %c0_0] : memref<1x512xf32, #tpu.memory_space<vmem>>, vector<1x512xf32>
    %c0_1 = arith.constant 0 : index
    %c0_2 = arith.constant 0 : index
    %1 = vector.load %arg3[%c0_1, %c0_2] : memref<1x512xf32, #tpu.memory_space<vmem>>, vector<1x512xf32>
    tpu.vector_store %arg3[%c0_1, %c0_2], %0 {strides = array<i32>} : memref<1x512xf32, #tpu.memory_space<vmem>>, vector<1x512xf32>,
    return
  }
  func.func @transform_0(%arg0: i32, %arg1: i32) -> (i32, i32) {
    %c0_i32 = arith.constant 0 : i32
    return %arg0, %arg1 : i32, i32
  }
  func.func @transform_1(%arg0: i32, %arg1: i32) -> (i32, i32) {
    %c0_i32 = arith.constant 0 : i32
    return %arg0, %arg1 : i32, i32
  }
}

</mosaic_0001>

<llo_original>
// kernel: tpu_custom_call.1
$region0: #{tpu_custom_call.1}
  #allocation0 [shape = 'u32[]', space=smem, size = 0x4, offset = 0x4, fixed_abs, tag = 'smem constant byte address 0x4 - core index']
  #allocation1 [shape = 'u32[144,128]{1,0:T(1,128)}', space=vmem, size = 0x12000, scoped, tag = 'internal scratch']
  %s0 = inlined_call_operand.hbm [shape: f32[1,2048], index: 0, kind: input, shape index: {}]
  %s1 = inlined_call_operand.hbm [shape: f32[1,2048], index: 1, kind: output, shape index: {}]
  %s2 = sld [smem:[#allocation0]]
  $region41: #{tpu_custom_call.1} parent=0
    _
  %s4 = ssub.s32 1, %s2
  %s5 = scalar_select 0, %s4, %s2
  $region1: #{tpu_custom_call.1} parent=0
    #allocation2 [shape = 'u8[4096]{0}', space=vmem, size = 0x1000, scoped, tag = 'input window, operand 0']
    #allocation3 [shape = 's32[2]{0}', space=sflag, size = 0x8, scoped, tag = 'scoped memory for tpu_custom_call.1']
    #allocation4 [shape = 's32[2]{0}', space=sflag, size = 0x8, scoped, tag = 'scoped memory for tpu_custom_call.1']
    #allocation5 [shape = 'u8[4096]{0}', space=vmem, size = 0x1000, scoped, tag = 'output window, operand 0']
    %6 = vsyncpa [#allocation3], 0
    %s7 = scalar_lea.sflag [#allocation3], 1
    %8 = vsyncpa %s7, 0
    %9 = vsyncpa [#allocation4], 0
    %s10 = scalar_lea.sflag [#allocation4], 1
    %11 = vsyncpa %s10, 0
    loop: start=0, step=1, limit=6
    $region2: #{tpu_custom_call.1} parent=1 // loop_pre_header
      _
    $region3: #{tpu_custom_call.1} parent=1 // loop_header
      %s13 = sphi 0, %s17
      %p14 = scmp.ge.s32.totalorder %s13, 6
      %s20 = sphi 0, %s32
      %s21 = sphi 0, %s28
      %s22 = sphi 0, %s20
      %s23 = sphi 0, %s21
      %s24 = sphi 0, %s22
      %s25 = sphi 0, %s23
      %s37 = sphi 0, %s39
      %s40 = sphi 0, %s37
      %s41 = sphi 0, %s40
      %s57 = sphi 0, %s41
      %s65 = sphi 0, %s67
      %s68 = sphi 0, %s65
      %s69 = sphi 0, %s68
      %s85 = sphi 0, %s69
    $region4: #{tpu_custom_call.1} parent=1 // loop_header_branch
      %16 = sbr.rel (%p14) target = $region8
    $region5: #{tpu_custom_call.1} parent=1 // loop_body
      %s18 = ssub.s32 %s13, 1
      %s19 = ssub.s32 %s13, 2
      %s26 = sadd.s32 1, %s21
      %p27 = scmp.ge.s32.totalorder %s26, 4
      %s28 = scalar_select %p27, 0, %s26
      %s29 = sadd.s32 1, %s20
      %s30 = scalar_select %p27, %s29, %s20
      %p31 = scmp.ge.s32.totalorder %s30, 1
      %s32 = scalar_select %p31, 0, %s30
      %s33 = ssub.s32 %s20, %s32
      %s34 = ssub.s32 %s21, %s28
      %s35 = sor.u32 %s33, %s34
      %p36 = scmp.eq.s32.totalorder %s35, 0
      %s38 = sadd.s32 %s37, 1
      %s39 = scalar_select %p36, %s37, %s38
      %p42 = pneg %p36
      %p43 = scmp.eq.s32.totalorder %s13, 3
      %p44 = por %p42, %p43
      %p45 = scmp.ne.s32.totalorder %s37, %s40
      %p46 = scmp.eq.s32.totalorder %s13, 0
      %p47 = por %p45, %p46
      %p48 = scmp.ne.s32.totalorder %s37, %s40
      %p49 = scmp.eq.s32.totalorder %s18, 3
      %p50 = por %p48, %p49
      %p51 = scmp.ne.s32.totalorder %s40, %s41
      %p52 = scmp.eq.s32.totalorder %s18, 0
      %p53 = por %p51, %p52
      %p54 = scmp.ne.s32.totalorder %s40, %s41
      %p55 = scmp.eq.s32.totalorder %s19, 3
      %p56 = por %p54, %p55
      %p58 = scmp.ne.s32.totalorder %s41, %s57
      %p59 = scmp.eq.s32.totalorder %s19, 0
      %p60 = por %p58, %p59
      %s61 = ssub.s32 %s20, %s32
      %s62 = ssub.s32 %s21, %s28
      %s63 = sor.u32 %s61, %s62
      %p64 = scmp.eq.s32.totalorder %s63, 0
      %s66 = sadd.s32 %s65, 1
      %s67 = scalar_select %p64, %s65, %s66
      %p70 = pneg %p64
      %p71 = scmp.eq.s32.totalorder %s13, 3
      %p72 = por %p70, %p71
      %p73 = scmp.ne.s32.totalorder %s65, %s68
      %p74 = scmp.eq.s32.totalorder %s13, 0
      %p75 = por %p73, %p74
      %p76 = scmp.ne.s32.totalorder %s65, %s68
      %p77 = scmp.eq.s32.totalorder %s18, 3
      %p78 = por %p76, %p77
      %p79 = scmp.ne.s32.totalorder %s68, %s69
      %p80 = scmp.eq.s32.totalorder %s18, 0
      %p81 = por %p79, %p80
      %p82 = scmp.ne.s32.totalorder %s68, %s69
      %p83 = scmp.eq.s32.totalorder %s19, 3
      %p84 = por %p82, %p83
      %p86 = scmp.ne.s32.totalorder %s69, %s85
      %p87 = scmp.eq.s32.totalorder %s19, 0
      %p88 = por %p86, %p87
      %p89 = scmp.le.s32.totalorder 1, %s13
      %p90 = scmp.lt.s32.totalorder %s13, 5
      %p91 = pnand %p89, %p90
      %p92 = pneg %p91
      // Predicated region
      $region9: #{tpu_custom_call.1} parent=5 // pred_check
        _
      $region10: #{tpu_custom_call.1} parent=5 // pred_check_branch
        %94 = sbr.rel (%p91) target = $region12
      $region11: #{tpu_custom_call.1} parent=5 // pred_region
        %s95 = ssub.s32 %s13, 1
      $region12: #{tpu_custom_call.1} parent=5 // pred_fallthru
        _
      %p96 = scmp.lt.s32.totalorder %s13, 4
      // Predicated region
      $region13: #{tpu_custom_call.1} parent=5 // pred_check
        %p97 = pneg %p96
      $region14: #{tpu_custom_call.1} parent=5 // pred_check_branch
        %99 = sbr.rel (%p97) target = $region16
      $region15: #{tpu_custom_call.1} parent=5 // pred_region
        // Predicated region
        $region17: #{tpu_custom_call.1} parent=15 // pred_check
          %p100 = pneg %p47
        $region18: #{tpu_custom_call.1} parent=15 // pred_check_branch
          %102 = sbr.rel (%p100) target = $region20
        $region19: #{tpu_custom_call.1} parent=15 // pred_region
          %s103 = sand.u32 %s37, 1
          %s104 = scalar_lea.sflag [#allocation3], %s103
          %s105 = sand.u32 %s37, 1
          %s106 = smul.addr %s105, 4
          %s107 = scalar_lea.vmem [#allocation2], %s106
          %s108 = smul.u32 4, %s21
          %s110 = ssub.s32 64, 64
          %111 = vsyncadd %s104, %s110
          %s112 = smul.addr %s20, 16
          %s113 = sadd.s32 %s108, %s112
          %s114 = smul.addr %s113, 16
          %s115 = scalar_lea.hbm %s0, %s114
          %s117 = sshll.u32 %s107, 4
          %s118 = int_to_ptr.vmem [resolvable:$true] %s117
          %120 = dma.hbm_to_vmem [thread:$0]  %s115, 64, %s118, %s104
        $region20: #{tpu_custom_call.1} parent=15 // pred_fallthru
          _
      $region16: #{tpu_custom_call.1} parent=5 // pred_fallthru
        _
      %p121 = scmp.le.s32.totalorder 1, %s13
      %p122 = scmp.lt.s32.totalorder %s13, 5
      %p123 = pnand %p121, %p122
      %p124 = pneg %p123
      // Predicated region
      $region21: #{tpu_custom_call.1} parent=5 // pred_check
        _
      $region22: #{tpu_custom_call.1} parent=5 // pred_check_branch
        %126 = sbr.rel (%p123) target = $region24
      $region23: #{tpu_custom_call.1} parent=5 // pred_region
        %s127 = ssub.s32 %s13, 1
        %s128 = sand.u32 %s40, 1
        %s129 = scalar_lea.sflag [#allocation3], %s128
        %s130 = sand.u32 %s40, 1
        %s131 = smul.addr %s130, 4
        %s132 = scalar_lea.vmem [#allocation2], %s131
        // Predicated region
        $region25: #{tpu_custom_call.1} parent=23 // pred_check
          %p133 = pneg %p53
        $region26: #{tpu_custom_call.1} parent=23 // pred_check_branch
          %135 = sbr.rel (%p133) target = $region28
        $region27: #{tpu_custom_call.1} parent=23 // pred_region
          %136 = dma.done %s129, 64
        $region28: #{tpu_custom_call.1} parent=23 // pred_fallthru
          _
        %s137 = sand.u32 %s40, 1
        %s138 = scalar_lea.sflag [#allocation3], %s137
        %s139 = sand.u32 %s40, 1
        %s140 = smul.addr %s139, 4
        %s141 = scalar_lea.vmem [#allocation2], %s140
        %p142 = pneg %p53
        %p143 = pneg %p50
        %p144 = pneg %p81
        %p145 = pneg %p78
        %s146 = sand.u32 %s68, 1
        %s147 = scalar_lea.sflag [#allocation4], %s146
        %s148 = sand.u32 %s68, 1
        %s149 = smul.addr %s148, 4
        %s150 = scalar_lea.vmem [#allocation5], %s149
        %s151 = smul.u32 4, %s23
        %s152 = smul.u32 4, %s23
        %v153 = vld [vmem:[%s132] sm:$0xf]
        %v154 = vlaneseq
        %vm155 = vcmp.ge.s32.totalorder %v154, 0
        %vm156 = vcmp.lt.s32.totalorder %v154, 512
        %vm157 = vmand %vm155, %vm156
        %158 = vst.msk [vmem:[%s150] sm:$0xf] %vm157, %v153
        %s159 = sand.u32 %s68, 1
        %s160 = scalar_lea.sflag [#allocation4], %s159
        %s161 = sand.u32 %s68, 1
        %s162 = smul.addr %s161, 4
        %s163 = scalar_lea.vmem [#allocation5], %s162
        // Predicated region
        $region29: #{tpu_custom_call.1} parent=23 // pred_check
          %p164 = pneg %p78
        $region30: #{tpu_custom_call.1} parent=23 // pred_check_branch
          %166 = sbr.rel (%p164) target = $region32
        $region31: #{tpu_custom_call.1} parent=23 // pred_region
          %s167 = smul.u32 4, %s23
          %s169 = ssub.s32 64, 64
          %170 = vsyncadd %s160, %s169
          %s171 = smul.addr %s22, 16
          %s172 = sadd.s32 %s167, %s171
          %s173 = smul.addr %s172, 16
          %s174 = scalar_lea.hbm %s1, %s173
          %s176 = sshll.u32 %s163, 4
          %s177 = int_to_ptr.vmem [resolvable:$true] %s176
          %179 = dma.vmem_to_hbm [thread:$0]  %s177, 64, %s174, %s160
        $region32: #{tpu_custom_call.1} parent=23 // pred_fallthru
          _
      $region24: #{tpu_custom_call.1} parent=5 // pred_fallthru
        _
      %p180 = scmp.le.s32.totalorder 2, %s13
      // Predicated region
      $region33: #{tpu_custom_call.1} parent=5 // pred_check
        %p181 = pneg %p180
      $region34: #{tpu_custom_call.1} parent=5 // pred_check_branch
        %183 = sbr.rel (%p181) target = $region36
      $region35: #{tpu_custom_call.1} parent=5 // pred_region
        %s184 = ssub.s32 %s13, 2
        // Predicated region
        $region37: #{tpu_custom_call.1} parent=35 // pred_check
          %p185 = pneg %p84
        $region38: #{tpu_custom_call.1} parent=35 // pred_check_branch
          %187 = sbr.rel (%p185) target = $region40
        $region39: #{tpu_custom_call.1} parent=35 // pred_region
          %s188 = sand.u32 %s69, 1
          %s189 = scalar_lea.sflag [#allocation4], %s188
          %s190 = sand.u32 %s69, 1
          %s191 = smul.addr %s190, 4
          %s192 = scalar_lea.vmem [#allocation5], %s191
          %193 = dma.done %s189, 64
        $region40: #{tpu_custom_call.1} parent=35 // pred_fallthru
          _
      $region36: #{tpu_custom_call.1} parent=5 // pred_fallthru
        _
    $region6: #{tpu_custom_call.1} parent=1 // loop_footer
      %s17 = sadd.s32 1, %s13
    $region7: #{tpu_custom_call.1} parent=1 // loop_footer_branch
      %12 = sbr.rel target = $region3
    $region8: #{tpu_custom_call.1} parent=1 // loop_exit
      _
    %194 = vsyncpa [#allocation3], 1
    %s195 = scalar_lea.sflag [#allocation3], 1
    %196 = vsyncpa %s195, 1
    %197 = vsyncpa [#allocation4], 1
    %s198 = scalar_lea.sflag [#allocation4], 1
    %199 = vsyncpa %s198, 1

</llo_original>
